<compile_context>
chip_gen: v7x
topology: tpu7x:2x2x1
jax: 0.10.0
libtpu: 0.0.40
codegen_flags: <defaults>
</compile_context>

<pallas_src>
import jax
import jax.numpy as jnp
from jax import lax
from jax.experimental import pallas as pl
from jax.experimental.pallas import tpu as pltpu


def _deconv_stats_kernel(w_ref, x_ref, b_ref, y_ref, sum_ref, sq_ref, sum_acc, sq_acc):
    """One M-tile of Y^T = W2D^T @ X2D^T + b, plus fused per-row BN statistics.

    w_ref:   (NK, Cin)  bf16 (resident)     x_ref: (Cin, tm) bf16
    b_ref:   (NK, 1)    f32  (resident)     y_ref: (NK, tm)  bf16 lane-dense tile
    sum_ref/sq_ref: (NK, 1) f32, written only on the last grid step.
    sum_acc/sq_acc: (NK, tm) f32 VMEM accumulators (elementwise adds on the VPU;
                    a single cross-lane reduce at the end keeps the XLU off the path).
    """
    i = pl.program_id(0)

    @pl.when(i == 0)
    def _init():
        sum_acc[...] = jnp.zeros_like(sum_acc)
        sq_acc[...] = jnp.zeros_like(sq_acc)

    acc = jnp.dot(w_ref[...], x_ref[...], preferred_element_type=jnp.float32)
    acc = acc + b_ref[...]                          # bias broadcast over lanes
    y_ref[...] = acc.astype(y_ref.dtype)

    sum_acc[...] = sum_acc[...] + acc
    sq_acc[...] = sq_acc[...] + acc * acc

    @pl.when(i == pl.num_programs(0) - 1)
    def _finalize():
        sum_ref[...] = jnp.sum(sum_acc[...], axis=1, keepdims=True)
        sq_ref[...] = jnp.sum(sq_acc[...], axis=1, keepdims=True)


def _bn_relu_apply_kernel(y_ref, scale_ref, shift_ref, o_ref):
    # y_ref: (NK, ta) bf16; scale/shift: (NK, 1) f32 (gamma/beta/mean/var pre-folded).
    y = y_ref[...].astype(jnp.float32)
    o_ref[...] = jnp.maximum(y * scale_ref[...] + shift_ref[...], 0.0).astype(o_ref.dtype)


def _pick_tile(m, t_max):
    """Largest multiple of 128 that divides m and is <= t_max."""
    t = (min(t_max, m) // 128) * 128
    while t > 128 and m % t:
        t -= 128
    assert t >= 128 and m % t == 0, f"no 128-multiple tile divides M={m}"
    return t


def deconv2d_bn_forward(x, w, b, gamma, beta, *, eps=1e-5,
                        tile_mm=1024, tile_apply=512,
                        compute_dtype=jnp.bfloat16):
    """x: (N, Cin, H, W) NCHW; w: (Cin, Cout, 2, 2); b/gamma/beta: (Cout,). f32 output."""
    N, Cin, H, W = x.shape
    Cin_w, Cout, KH, KW = w.shape
    assert Cin_w == Cin
    assert KH == 2 and KW == 2, "kernel implements the stride==kernel_size==2 case"

    M = N * H * W
    NK = Cout * KH * KW
    Hout, Wout = H * KH, W * KW

    assert M % 128 == 0, "N*H*W must be a multiple of 128"
    # TODO(synk): pad M and mask the ragged tail (incl. stats) when M % 128 != 0.
    tm = _pick_tile(M, tile_mm)
    ta = _pick_tile(M, tile_apply)

    # Small (X/weight-sized) layout prep; the Y-sized tensor never takes an extra
    # XLA transpose between the two kernels.
    x2t = jnp.transpose(x, (1, 0, 2, 3)).reshape(Cin, M).astype(compute_dtype)  # (Cin, M)
    w2t = jnp.transpose(w.reshape(Cin, NK)).astype(compute_dtype)               # (NK, Cin); row = co*4+k*2+l
    b2 = jnp.repeat(b.astype(jnp.float32), KH * KW).reshape(NK, 1)

    # ---- kernel 1: deconv-as-matmul (lane-dense (NK, M) output) + fused BN stats ----
    y_t, s_sum, s_sq = pl.pallas_call(
        _deconv_stats_kernel,
        out_shape=(
            jax.ShapeDtypeStruct((NK, M), compute_dtype),
            jax.ShapeDtypeStruct((NK, 1), jnp.float32),
            jax.ShapeDtypeStruct((NK, 1), jnp.float32),
        ),
        grid=(M // tm,),
        in_specs=[
            pl.BlockSpec((NK, Cin), lambda i: (0, 0)),
            pl.BlockSpec((Cin, tm), lambda i: (0, i)),
            pl.BlockSpec((NK, 1), lambda i: (0, 0)),
        ],
        out_specs=(
            pl.BlockSpec((NK, tm), lambda i: (0, i)),
            pl.BlockSpec((NK, 1), lambda i: (0, 0)),
            pl.BlockSpec((NK, 1), lambda i: (0, 0)),
        ),
        scratch_shapes=[
            pltpu.VMEM((NK, tm), jnp.float32),
            pltpu.VMEM((NK, tm), jnp.float32),
        ],
        # 'arbitrary': the resident stat accumulators span the whole grid.
        compiler_params=pltpu.CompilerParams(
            dimension_semantics=("arbitrary",),
            vmem_limit_bytes=32 * 1024 * 1024,
        ),
    )(w2t, x2t, b2)

    # ---- tiny per-channel fold of stats + gamma/beta (O(Cout) work, plain XLA) ----
    count = jnp.float32(M * KH * KW)                      # == N * Hout * Wout
    ch_sum = s_sum[:, 0].reshape(Cout, KH * KW).sum(axis=1)
    ch_sq = s_sq[:, 0].reshape(Cout, KH * KW).sum(axis=1)
    mean = ch_sum / count
    var = jnp.maximum(ch_sq / count - mean * mean, 0.0)   # biased (train-mode) variance
    inv = lax.rsqrt(var + eps)
    scale = gamma.astype(jnp.float32) * inv
    shift = beta.astype(jnp.float32) - mean * scale
    scale_rows = jnp.repeat(scale, KH * KW).reshape(NK, 1)
    shift_rows = jnp.repeat(shift, KH * KW).reshape(NK, 1)

    # ---- kernel 2: tiled BN apply + ReLU (parallel over M tiles, lane-dense I/O) ----
    out_cm = pl.pallas_call(
        _bn_relu_apply_kernel,
        out_shape=jax.ShapeDtypeStruct((NK, M), jnp.float32),
        grid=(M // ta,),
        in_specs=[
            pl.BlockSpec((NK, ta), lambda i: (0, i)),
            pl.BlockSpec((NK, 1), lambda i: (0, 0)),
            pl.BlockSpec((NK, 1), lambda i: (0, 0)),
        ],
        out_specs=pl.BlockSpec((NK, ta), lambda i: (0, i)),
        compiler_params=pltpu.CompilerParams(
            dimension_semantics=("parallel",),
            vmem_limit_bytes=32 * 1024 * 1024,
        ),
    )(y_t, scale_rows, shift_rows)

    # Single remaining layout op: interleave the 2x2 taps into NCHW.
    # TODO(synk): the stride-2 tap scatter is not expressible as a rectangular BlockSpec,
    # so this one transpose stays in XLA.
    out = out_cm.reshape(Cout, KH, KW, N, H, W)
    out = jnp.transpose(out, (3, 0, 4, 1, 5, 2)).reshape(N, Cout, Hout, Wout)
    return out


def _reference_forward(x, w, b, gamma, beta, eps=1e-5):
    # Pure-JAX f32 reference of the PyTorch forward (train-mode BN).
    N, Cin, H, W = x.shape
    Cout, KH, KW = w.shape[1], w.shape[2], w.shape[3]
    y = jnp.einsum("ncij,cokl->noikjl", x, w).reshape(N, Cout, H * KH, W * KW)
    y = y + b.reshape(1, Cout, 1, 1)
    mean = jnp.mean(y, axis=(0, 2, 3), keepdims=True)
    var = jnp.mean(jnp.square(y - mean), axis=(0, 2, 3), keepdims=True)
    yn = (y - mean) * lax.rsqrt(var + eps)
    yn = yn * gamma.reshape(1, Cout, 1, 1) + beta.reshape(1, Cout, 1, 1)
    return jnp.maximum(yn, 0.0)


if __name__ == "__main__":
    key = jax.random.PRNGKey(0)
    k_x, k_w, k_b = jax.random.split(key, 3)

    Cin, Cout, KH, KW = 4, 8, 2, 2
    # Second config exercises the multi-step (pipelined / accumulating) grid paths.
    for (N, H, W) in [(2, 16, 16), (2, 32, 32)]:
        x = jax.random.normal(k_x, (N, Cin, H, W), dtype=jnp.float32)
        w = jax.random.normal(k_w, (Cin, Cout, KH, KW), dtype=jnp.float32) * 0.1
        b = jax.random.normal(k_b, (Cout,), dtype=jnp.float32) * 0.1
        gamma = jnp.ones((Cout,), dtype=jnp.float32)   # BatchNorm2d default init
        beta = jnp.zeros((Cout,), dtype=jnp.float32)

        out = deconv2d_bn_forward(x, w, b, gamma, beta)
        out = jax.block_until_ready(out)

        ref = _reference_forward(x, w, b, gamma, beta)
        assert out.shape == (N, Cout, H * KH, W * KW)
        # bf16 MXU inputs + bf16 Y intermediate -> ~1e-2-level quantization noise vs f32 ref.
        assert jnp.allclose(out, ref, rtol=2e-2, atol=2e-2), "mismatch vs reference"

    print("KERNEL_OK")
</pallas_src>

<mosaic_0001>
module attributes {stable_mosaic.version = 11 : i64} {
  func.func @_deconv_stats_kernel(%arg0: i32, %arg1: memref<32x4xbf16, #tpu.memory_space<vmem>>, %arg2: memref<4x512xbf16, #tpu.memory_space<vmem>>, %arg3: memref<32x1xf32, #tpu.memory_space<vmem>>, %arg4: memref<32x512xbf16, #tpu.memory_space<vmem>>, %arg5: memref<32x1xf32, #tpu.memory_space<vmem>>, %arg6: memref<32x1xf32, #tpu.memory_space<vmem>>, %arg7: memref<32x512xf32, #tpu.memory_space<vmem>>, %arg8: memref<32x512xf32, #tpu.memory_space<vmem>>) attributes {dimension_semantics = [#tpu.dimension_semantics<arbitrary>], iteration_bounds = array<i64: 1>, scalar_prefetch = 0 : i64, scratch_operands = 2 : i64, tpu.core_type = #tpu.core_type<tc>, window_params = [{pipeline_mode = #tpu.pipeline_mode<synchronous>, transform_indices = @transform_0, window_bounds = array<i64: 32, 4>}, {transform_indices = @transform_1, window_bounds = array<i64: 4, 512>}, {pipeline_mode = #tpu.pipeline_mode<synchronous>, transform_indices = @transform_2, window_bounds = array<i64: 32, 1>}, {transform_indices = @transform_3, window_bounds = array<i64: 32, 512>}, {pipeline_mode = #tpu.pipeline_mode<synchronous>, transform_indices = @transform_4, window_bounds = array<i64: 32, 1>}, {pipeline_mode = #tpu.pipeline_mode<synchronous>, transform_indices = @transform_5, window_bounds = array<i64: 32, 1>}]} {
    %c0_i32 = arith.constant 0 : i32
    %0 = arith.cmpi eq, %arg0, %c0_i32 : i32
    %1 = arith.extui %0 : i1 to i32
    %c0_i32_0 = arith.constant 0 : i32
    %2 = arith.cmpi ne, %1, %c0_i32_0 : i32
    scf.if %2 {
      %cst_18 = arith.constant 0.000000e+00 : f32
      %21 = vector.broadcast %cst_18 : f32 to vector<32x512xf32>
      %c0_19 = arith.constant 0 : index
      %c0_20 = arith.constant 0 : index
      %22 = vector.load %arg7[%c0_19, %c0_20] : memref<32x512xf32, #tpu.memory_space<vmem>>, vector<32x512xf32>
      tpu.vector_store %arg7[%c0_19, %c0_20], %21 {strides = array<i32>} : memref<32x512xf32, #tpu.memory_space<vmem>>, vector<32x512xf32>,
      %cst_21 = arith.constant 0.000000e+00 : f32
      %23 = vector.broadcast %cst_21 : f32 to vector<32x512xf32>
      %c0_22 = arith.constant 0 : index
      %c0_23 = arith.constant 0 : index
      %24 = vector.load %arg8[%c0_22, %c0_23] : memref<32x512xf32, #tpu.memory_space<vmem>>, vector<32x512xf32>
      tpu.vector_store %arg8[%c0_22, %c0_23], %23 {strides = array<i32>} : memref<32x512xf32, #tpu.memory_space<vmem>>, vector<32x512xf32>,
    } else {
    }
    %c0 = arith.constant 0 : index
    %c0_1 = arith.constant 0 : index
    %3 = vector.load %arg1[%c0, %c0_1] : memref<32x4xbf16, #tpu.memory_space<vmem>>, vector<32x4xbf16>
    %c0_2 = arith.constant 0 : index
    %c0_3 = arith.constant 0 : index
    %4 = vector.load %arg2[%c0_2, %c0_3] : memref<4x512xbf16, #tpu.memory_space<vmem>>, vector<4x512xbf16>
    %cst = arith.constant dense<0.000000e+00> : vector<32x512xf32>
    %5 = tpu.matmul %3, %4, %cst {dimension_numbers = #tpu.dot_dimension_numbers<[1], [0], [0], [1], [0, 0, 1, 1], [], []>} : vector<32x4xbf16>, vector<4x512xbf16>, vector<32x512xf32> -> vector<32x512xf32>
    %c0_4 = arith.constant 0 : index
    %c0_5 = arith.constant 0 : index
    %6 = vector.load %arg3[%c0_4, %c0_5] : memref<32x1xf32, #tpu.memory_space<vmem>>, vector<32x1xf32>
    %7 = vector.broadcast %6 : vector<32x1xf32> to vector<32x512xf32>
    %8 = arith.addf %5, %7 : vector<32x512xf32>
    %9 = arith.truncf %8 : vector<32x512xf32> to vector<32x512xbf16>
    %c0_6 = arith.constant 0 : index
    %c0_7 = arith.constant 0 : index
    %10 = vector.load %arg4[%c0_6, %c0_7] : memref<32x512xbf16, #tpu.memory_space<vmem>>, vector<32x512xbf16>
    tpu.vector_store %arg4[%c0_6, %c0_7], %9 {strides = array<i32>} : memref<32x512xbf16, #tpu.memory_space<vmem>>, vector<32x512xbf16>,
    %c0_8 = arith.constant 0 : index
    %c0_9 = arith.constant 0 : index
    %11 = vector.load %arg7[%c0_8, %c0_9] : memref<32x512xf32, #tpu.memory_space<vmem>>, vector<32x512xf32>
    %12 = arith.addf %11, %8 : vector<32x512xf32>
    %c0_10 = arith.constant 0 : index
    %c0_11 = arith.constant 0 : index
    %13 = vector.load %arg7[%c0_10, %c0_11] : memref<32x512xf32, #tpu.memory_space<vmem>>, vector<32x512xf32>
    tpu.vector_store %arg7[%c0_10, %c0_11], %12 {strides = array<i32>} : memref<32x512xf32, #tpu.memory_space<vmem>>, vector<32x512xf32>,
    %c0_12 = arith.constant 0 : index
    %c0_13 = arith.constant 0 : index
    %14 = vector.load %arg8[%c0_12, %c0_13] : memref<32x512xf32, #tpu.memory_space<vmem>>, vector<32x512xf32>
    %15 = arith.mulf %8, %8 : vector<32x512xf32>
    %16 = arith.addf %14, %15 : vector<32x512xf32>
    %c0_14 = arith.constant 0 : index
    %c0_15 = arith.constant 0 : index
    %17 = vector.load %arg8[%c0_14, %c0_15] : memref<32x512xf32, #tpu.memory_space<vmem>>, vector<32x512xf32>
    tpu.vector_store %arg8[%c0_14, %c0_15], %16 {strides = array<i32>} : memref<32x512xf32, #tpu.memory_space<vmem>>, vector<32x512xf32>,
    %c0_i32_16 = arith.constant 0 : i32
    %18 = arith.cmpi eq, %arg0, %c0_i32_16 : i32
    %19 = arith.extui %18 : i1 to i32
    %c0_i32_17 = arith.constant 0 : i32
    %20 = arith.cmpi ne, %19, %c0_i32_17 : i32
    scf.if %20 {
      %c0_18 = arith.constant 0 : index
      %c0_19 = arith.constant 0 : index
      %21 = vector.load %arg7[%c0_18, %c0_19] : memref<32x512xf32, #tpu.memory_space<vmem>>, vector<32x512xf32>
      %cst_20 = arith.constant dense<0.000000e+00> : vector<32xf32>
      %22 = vector.multi_reduction <add>, %21, %cst_20 [1] : vector<32x512xf32> to vector<32xf32>
      %23 = vector.shape_cast %22 : vector<32xf32> to vector<32x1xf32>
      %c0_21 = arith.constant 0 : index
      %c0_22 = arith.constant 0 : index
      %24 = vector.load %arg5[%c0_21, %c0_22] : memref<32x1xf32, #tpu.memory_space<vmem>>, vector<32x1xf32>
      tpu.vector_store %arg5[%c0_21, %c0_22], %23 {strides = array<i32>} : memref<32x1xf32, #tpu.memory_space<vmem>>, vector<32x1xf32>,
      %c0_23 = arith.constant 0 : index
      %c0_24 = arith.constant 0 : index
      %25 = vector.load %arg8[%c0_23, %c0_24] : memref<32x512xf32, #tpu.memory_space<vmem>>, vector<32x512xf32>
      %cst_25 = arith.constant dense<0.000000e+00> : vector<32xf32>
      %26 = vector.multi_reduction <add>, %25, %cst_25 [1] : vector<32x512xf32> to vector<32xf32>
      %27 = vector.shape_cast %26 : vector<32xf32> to vector<32x1xf32>
      %c0_26 = arith.constant 0 : index
      %c0_27 = arith.constant 0 : index
      %28 = vector.load %arg6[%c0_26, %c0_27] : memref<32x1xf32, #tpu.memory_space<vmem>>, vector<32x1xf32>
      tpu.vector_store %arg6[%c0_26, %c0_27], %27 {strides = array<i32>} : memref<32x1xf32, #tpu.memory_space<vmem>>, vector<32x1xf32>,
    } else {
    }
    return
  }
  func.func @transform_0(%arg0: i32) -> (i32, i32) {
    %c0_i32 = arith.constant 0 : i32
    %c0_i32_0 = arith.constant 0 : i32
    %c0_i32_1 = arith.constant 0 : i32
    return %c0_i32, %c0_i32_0 : i32, i32
  }
  func.func @transform_1(%arg0: i32) -> (i32, i32) {
    %c0_i32 = arith.constant 0 : i32
    %c0_i32_0 = arith.constant 0 : i32
    return %c0_i32, %arg0 : i32, i32
  }
  func.func @transform_2(%arg0: i32) -> (i32, i32) {
    %c0_i32 = arith.constant 0 : i32
    %c0_i32_0 = arith.constant 0 : i32
    %c0_i32_1 = arith.constant 0 : i32
    return %c0_i32, %c0_i32_0 : i32, i32
  }
  func.func @transform_3(%arg0: i32) -> (i32, i32) {
    %c0_i32 = arith.constant 0 : i32
    %c0_i32_0 = arith.constant 0 : i32
    return %c0_i32, %arg0 : i32, i32
  }
  func.func @transform_4(%arg0: i32) -> (i32, i32) {
    %c0_i32 = arith.constant 0 : i32
    %c0_i32_0 = arith.constant 0 : i32
    %c0_i32_1 = arith.constant 0 : i32
    return %c0_i32, %c0_i32_0 : i32, i32
  }
  func.func @transform_5(%arg0: i32) -> (i32, i32) {
    %c0_i32 = arith.constant 0 : i32
    %c0_i32_0 = arith.constant 0 : i32
    %c0_i32_1 = arith.constant 0 : i32
    return %c0_i32, %c0_i32_0 : i32, i32
  }
}

</mosaic_0001>

<llo_original>
// kernel: tpu_custom_call.1
$region0: #{tpu_custom_call.1}
  #allocation0 [shape = 'u32[]', space=smem, size = 0x4, offset = 0x4, fixed_abs, tag = 'smem constant byte address 0x4 - core index']
  #allocation1 [shape = 'u32[144,128]{1,0:T(1,128)}', space=vmem, size = 0x12000, scoped, tag = 'internal scratch']
  #allocation2 [shape = 'f32[32,512]{1,0:T(8,128)}', space=vmem, size = 0x10000, scoped, tag = 'scratch operand']
  #allocation3 [shape = 'f32[32,512]{1,0:T(8,128)}', space=vmem, size = 0x10000, scoped, tag = 'scratch operand']
  %s0 = inlined_call_operand.vmem [shape: bf16[32,4], index: 0, kind: input, shape index: {}]
  %s1 = inlined_call_operand.vmem [shape: bf16[4,512], index: 1, kind: input, shape index: {}]
  %s2 = inlined_call_operand.vmem [shape: f32[32,1], index: 2, kind: input, shape index: {}]
  %s3 = inlined_call_operand.hbm [shape: bf16[32,512], index: 3, kind: output, shape index: {0}]
  %s4 = inlined_call_operand.vmem [shape: f32[32,1], index: 4, kind: output, shape index: {1}]
  %s5 = inlined_call_operand.vmem [shape: f32[32,1], index: 5, kind: output, shape index: {2}]
  %6 = xla_tuple %s3, %s4, %s5
  %s7 = sld [smem:[#allocation0]]
  $region46: #{tpu_custom_call.1} parent=0
    _
  %s9 = ssub.s32 1, %s7
  %s10 = scalar_select 0, %s9, %s7
  $region1: #{tpu_custom_call.1} parent=0
    #allocation4 [shape = 'u8[32768]{0}', space=vmem, size = 0x8000, scoped, tag = 'output window, operand 0, single buffered']
    #allocation5 [shape = 's32[1]{0}', space=sflag, size = 0x4, scoped, tag = 'scoped memory for tpu_custom_call.1']
    %11 = vsyncpa [#allocation5], 0
    // Predicated region
    $region2: #{tpu_custom_call.1} parent=1 // pred_check
      _
    $region3: #{tpu_custom_call.1} parent=1 // pred_check_branch
      %13 = sbr.rel (0) target = $region5
    $region4: #{tpu_custom_call.1} parent=1 // pred_region
      _
    $region5: #{tpu_custom_call.1} parent=1 // pred_fallthru
      _
    // Predicated region
    $region6: #{tpu_custom_call.1} parent=1 // pred_check
      _
    $region7: #{tpu_custom_call.1} parent=1 // pred_check_branch
      %15 = sbr.rel (0) target = $region9
    $region8: #{tpu_custom_call.1} parent=1 // pred_region
      _
    $region9: #{tpu_custom_call.1} parent=1 // pred_fallthru
      _
    // Predicated region
    $region10: #{tpu_custom_call.1} parent=1 // pred_check
      _
    $region11: #{tpu_custom_call.1} parent=1 // pred_check_branch
      %17 = sbr.rel (0) target = $region13
    $region12: #{tpu_custom_call.1} parent=1 // pred_region
      _
    $region13: #{tpu_custom_call.1} parent=1 // pred_fallthru
      _
    %p19 = scmp.eq.s32.totalorder 0, 0
    // Predicated region
    $region14: #{tpu_custom_call.1} parent=1 // pred_check
      %p20 = pneg %p19
    $region15: #{tpu_custom_call.1} parent=1 // pred_check_branch
      %22 = sbr.rel (%p20) target = $region17
    $region16: #{tpu_custom_call.1} parent=1 // pred_region
      %23 = vst [vmem:[#allocation2] sm:$0xff] 0.0
      %24 = vst [vmem:[#allocation2 + $0x8] sm:$0xff] 0.0
      %25 = vst [vmem:[#allocation2 + $0x10] sm:$0xff] 0.0
      %26 = vst [vmem:[#allocation2 + $0x18] sm:$0xff] 0.0
      %27 = vst [vmem:[#allocation2 + $0x20] sm:$0xff] 0.0
      %28 = vst [vmem:[#allocation2 + $0x28] sm:$0xff] 0.0
      %29 = vst [vmem:[#allocation2 + $0x30] sm:$0xff] 0.0
      %30 = vst [vmem:[#allocation2 + $0x38] sm:$0xff] 0.0
      %31 = vst [vmem:[#allocation2 + $0x40] sm:$0xff] 0.0
      %32 = vst [vmem:[#allocation2 + $0x48] sm:$0xff] 0.0
      %33 = vst [vmem:[#allocation2 + $0x50] sm:$0xff] 0.0
      %34 = vst [vmem:[#allocation2 + $0x58] sm:$0xff] 0.0
      %35 = vst [vmem:[#allocation2 + $0x60] sm:$0xff] 0.0
      %36 = vst [vmem:[#allocation2 + $0x68] sm:$0xff] 0.0
      %37 = vst [vmem:[#allocation2 + $0x70] sm:$0xff] 0.0
      %38 = vst [vmem:[#allocation2 + $0x78] sm:$0xff] 0.0
      %39 = vst [vmem:[#allocation3] sm:$0xff] 0.0
      %40 = vst [vmem:[#allocation3 + $0x8] sm:$0xff] 0.0
      %41 = vst [vmem:[#allocation3 + $0x10] sm:$0xff] 0.0
      %42 = vst [vmem:[#allocation3 + $0x18] sm:$0xff] 0.0
      %43 = vst [vmem:[#allocation3 + $0x20] sm:$0xff] 0.0
      %44 = vst [vmem:[#allocation3 + $0x28] sm:$0xff] 0.0
      %45 = vst [vmem:[#allocation3 + $0x30] sm:$0xff] 0.0
      %46 = vst [vmem:[#allocation3 + $0x38] sm:$0xff] 0.0
      %47 = vst [vmem:[#allocation3 + $0x40] sm:$0xff] 0.0
      %48 = vst [vmem:[#allocation3 + $0x48] sm:$0xff] 0.0
      %49 = vst [vmem:[#allocation3 + $0x50] sm:$0xff] 0.0
      %50 = vst [vmem:[#allocation3 + $0x58] sm:$0xff] 0.0
      %51 = vst [vmem:[#allocation3 + $0x60] sm:$0xff] 0.0
      %52 = vst [vmem:[#allocation3 + $0x68] sm:$0xff] 0.0
      %53 = vst [vmem:[#allocation3 + $0x70] sm:$0xff] 0.0
      %54 = vst [vmem:[#allocation3 + $0x78] sm:$0xff] 0.0
    $region17: #{tpu_custom_call.1} parent=1 // pred_fallthru
      _
    %v55 = vld [vmem:[%s0] sm:$0xf]
    %v56 = vld [vmem:[%s0 + $0x4] sm:$0xf]
    %v57 = vld [vmem:[%s0 + $0x8] sm:$0xf]
    %v58 = vld [vmem:[%s0 + $0xc] sm:$0xf]
    %v59 = vld [vmem:[%s1] sm:$0xff]
    %v60 = vld [vmem:[%s2] sm:$0xff]
    %v61 = vld [vmem:[%s2 + $0x8] sm:$0xff]
    %v62 = vld [vmem:[%s2 + $0x10] sm:$0xff]
    %v63 = vld [vmem:[%s2 + $0x18] sm:$0xff]
    %65 = vset.pattern.permute.xlu0 0
    %66 = vperm.xlu0 %65, %v60
    %v67 = vpop.permute.xlu0 %66
    %70 = vset.pattern.permute.xlu0 0
    %71 = vperm.xlu0 %70, %v61
    %v72 = vpop.permute.xlu0 %71
    %75 = vset.pattern.permute.xlu0 0
    %76 = vperm.xlu0 %75, %v62
    %v77 = vpop.permute.xlu0 %76
    %80 = vset.pattern.permute.xlu0 0
    %81 = vperm.xlu0 %80, %v63
    %v82 = vpop.permute.xlu0 %81
    %v88 = vunpack.c.l.b16 %v55
    %v89 = vunpack.c.l.b16 %v56
    %v90 = vunpack.c.l.b16 %v57
    %v91 = vunpack.c.l.b16 %v58
    %v92 = vpack.c.b16 %v89, %v88
    %v93 = vpack.c.b16 %v91, %v90
    %v95 = vcombine.high %v59, %v59
    %v97 = vunpack.c.l.s4 1983009808
    %v98 = vunpack.c.0.s8 %v97
    %v99 = vlaneseq
    %v100 = vshrl.u32 %v99, 7
    %v101 = vsub.s32 %v98, %v100
    %v102 = vrot.slane %v59, %v101
    %v104 = vunpack.c.l.s4 1983009808
    %v105 = vunpack.c.0.s8 %v104
    %v106 = vlaneseq
    %v107 = vshrl.u32 %v106, 7
    %v108 = vsub.s32 %v105, %v107
    %v109 = vrot.slane %v95, %v108
    %v110 = vcombine.high %v102, %v102
    %v111 = vcombine.high %v109, %v109
    %vm112 = vcmask 31744
    %v114 = vsel %vm112, %v92, 0
    %v117 = vsel %vm112, %v93, 0
    %vm119 = vcmask 1041408
    %v121 = vsel %vm119, %v102, 0
    %v124 = vsel %vm119, %v110, 0
    %v127 = vsel %vm119, %v109, 0
    %v130 = vsel %vm119, %v111, 0
    %132 = vmatprep.subr.bf16.mxu0 %v124
    %133 = vmatpush1.bf16.msra.mxu0 %v121
    %134 = vmatprep.subr.bf16.mxu0 0
    %135 = vmatpush1.bf16.msra.mxu0 0
    %136 = vmatprep.subr.bf16.mxu0 0
    %137 = vmatpush1.bf16.msra.mxu0 0
    %138 = vmatprep.subr.bf16.mxu0 0
    %139 = vmatpush1.bf16.msra.mxu0 0
    %140 = vmatprep.subr.bf16.mxu0 0
    %141 = vmatpush1.bf16.msra.mxu0 0
    %142 = vmatprep.subr.bf16.mxu0 0
    %143 = vmatpush1.bf16.msra.mxu0 0
    %144 = vmatprep.subr.bf16.mxu0 0
    %145 = vmatpush1.bf16.msra.mxu0 0
    %146 = vmatprep.subr.bf16.mxu0 0
    %147 = vmatpush1.bf16.msra.mxu0 0
    %148 = vmatprep.subr.bf16.mxu0 0
    %149 = vmatpush1.bf16.msra.mxu0 0
    %150 = vmatprep.subr.bf16.mxu0 0
    %151 = vmatpush1.bf16.msra.mxu0 0
    %152 = vmatprep.subr.bf16.mxu0 0
    %153 = vmatpush1.bf16.msra.mxu0 0
    %154 = vmatprep.subr.bf16.mxu0 0
    %155 = vmatpush1.bf16.msra.mxu0 0
    %156 = vmatprep.subr.bf16.mxu0 0
    %157 = vmatpush1.bf16.msra.mxu0 0
    %158 = vmatprep.subr.bf16.mxu0 0
    %159 = vmatpush1.bf16.msra.mxu0 0
    %160 = vmatprep.subr.bf16.mxu0 0
    %161 = vmatpush1.bf16.msra.mxu0 0
    %162 = vmatprep.subr.bf16.mxu0 0
    %163 = vmatpush1.bf16.msra.mxu0 0
    %164 = vmatprep.mubr.bf16.mxu0 0
    %165 = vmatmul.mubr.bf16.gmra.mrb[0].mxu0 %v114
    %v166 = vpop.f32.mrb[0].mxu0
    %v167 = vadd.f32 %v67, %v166
    %v168 = vpop.f32.mrb[0].mxu0
    %v169 = vadd.f32 %v67, %v168
    %v170 = vpop.f32.mrb[0].mxu0
    %v171 = vadd.f32 %v72, %v170
    %v172 = vpop.f32.mrb[0].mxu0
    %v173 = vadd.f32 %v72, %v172
    %174 = vmatprep.mubr.bf16.mxu0 0
    %175 = vmatmul.mubr.bf16.gmra.mrb[0].mxu0 %v117
    %v176 = vpop.f32.mrb[0].mxu0
    %v177 = vadd.f32 %v77, %v176
    %v178 = vpop.f32.mrb[0].mxu0
    %v179 = vadd.f32 %v77, %v178
    %v180 = vpop.f32.mrb[0].mxu0
    %v181 = vadd.f32 %v82, %v180
    %v182 = vpop.f32.mrb[0].mxu0
    %v183 = vadd.f32 %v82, %v182
    %184 = vdwg.mxu0
    %185 = vmatprep.subr.bf16.mxu0 %v130
    %186 = vmatpush1.bf16.msra.mxu0 %v127
    %187 = vmatprep.subr.bf16.mxu0 0
    %188 = vmatpush1.bf16.msra.mxu0 0
    %189 = vmatprep.subr.bf16.mxu0 0
    %190 = vmatpush1.bf16.msra.mxu0 0
    %191 = vmatprep.subr.bf16.mxu0 0
    %192 = vmatpush1.bf16.msra.mxu0 0
    %193 = vmatprep.subr.bf16.mxu0 0
    %194 = vmatpush1.bf16.msra.mxu0 0
    %195 = vmatprep.subr.bf16.mxu0 0
    %196 = vmatpush1.bf16.msra.mxu0 0
    %197 = vmatprep.subr.bf16.mxu0 0
    %198 = vmatpush1.bf16.msra.mxu0 0
    %199 = vmatprep.subr.bf16.mxu0 0
    %200 = vmatpush1.bf16.msra.mxu0 0
    %201 = vmatprep.subr.bf16.mxu0 0
    %202 = vmatpush1.bf16.msra.mxu0 0
    %203 = vmatprep.subr.bf16.mxu0 0
    %204 = vmatpush1.bf16.msra.mxu0 0
    %205 = vmatprep.subr.bf16.mxu0 0
    %206 = vmatpush1.bf16.msra.mxu0 0
    %207 = vmatprep.subr.bf16.mxu0 0
    %208 = vmatpush1.bf16.msra.mxu0 0
    %209 = vmatprep.subr.bf16.mxu0 0
    %210 = vmatpush1.bf16.msra.mxu0 0
    %211 = vmatprep.subr.bf16.mxu0 0
    %212 = vmatpush1.bf16.msra.mxu0 0
    %213 = vmatprep.subr.bf16.mxu0 0
    %214 = vmatpush1.bf16.msra.mxu0 0
    %215 = vmatprep.subr.bf16.mxu0 0
    %216 = vmatpush1.bf16.msra.mxu0 0
    %217 = vmatprep.mubr.bf16.mxu0 0
    %218 = vmatmul.mubr.bf16.gmra.mrb[0].mxu0 %v114
    %v219 = vpop.f32.mrb[0].mxu0
    %v220 = vadd.f32 %v67, %v219
    %v221 = vpop.f32.mrb[0].mxu0
    %v222 = vadd.f32 %v67, %v221
    %v223 = vpop.f32.mrb[0].mxu0
    %v224 = vadd.f32 %v72, %v223
    %v225 = vpop.f32.mrb[0].mxu0
    %v226 = vadd.f32 %v72, %v225
    %227 = vmatprep.mubr.bf16.mxu0 0
    %228 = vmatmul.mubr.bf16.gmra.mrb[0].mxu0 %v117
    %v229 = vpop.f32.mrb[0].mxu0
    %v230 = vadd.f32 %v77, %v229
    %v231 = vpop.f32.mrb[0].mxu0
    %v232 = vadd.f32 %v77, %v231
    %v233 = vpop.f32.mrb[0].mxu0
    %v234 = vadd.f32 %v82, %v233
    %v235 = vpop.f32.mrb[0].mxu0
    %v236 = vadd.f32 %v82, %v235
    %237 = vdwg.mxu0
    %v238 = vpack.c.bf16 %v171, %v167
    %v239 = vpack.c.bf16 %v173, %v169
    %v240 = vpack.c.bf16 %v224, %v220
    %v241 = vpack.c.bf16 %v226, %v222
    %v242 = vpack.c.bf16 %v181, %v177
    %v243 = vpack.c.bf16 %v183, %v179
    %v244 = vpack.c.bf16 %v234, %v230
    %v245 = vpack.c.bf16 %v236, %v232
    %v254 = vunpack.c.l.b16 %v238
    %v255 = vunpack.c.l.b16 %v239
    %v256 = vunpack.c.l.b16 %v240
    %v257 = vunpack.c.l.b16 %v241
    %v258 = vunpack.c.h.b16 %v238
    %v259 = vunpack.c.h.b16 %v239
    %v260 = vunpack.c.h.b16 %v240
    %v261 = vunpack.c.h.b16 %v241
    %v262 = vunpack.c.l.b16 %v242
    %v263 = vunpack.c.l.b16 %v243
    %v264 = vunpack.c.l.b16 %v244
    %v265 = vunpack.c.l.b16 %v245
    %v266 = vunpack.c.h.b16 %v242
    %v267 = vunpack.c.h.b16 %v243
    %v268 = vunpack.c.h.b16 %v244
    %v269 = vunpack.c.h.b16 %v245
    %v270 = vpack.c.b16 %v255, %v254
    %v271 = vpack.c.b16 %v257, %v256
    %v272 = vpack.c.b16 %v259, %v258
    %v273 = vpack.c.b16 %v261, %v260
    %v274 = vpack.c.b16 %v263, %v262
    %v275 = vpack.c.b16 %v265, %v264
    %v276 = vpack.c.b16 %v267, %v266
    %v277 = vpack.c.b16 %v269, %v268
    %286 = vst [vmem:[#allocation4] sm:$0xff] %v270
    %287 = vst [vmem:[#allocation4 + $0x8] sm:$0xff] %v271
    %288 = vst [vmem:[#allocation4 + $0x10] sm:$0xff] %v272
    %289 = vst [vmem:[#allocation4 + $0x18] sm:$0xff] %v273
    %290 = vst [vmem:[#allocation4 + $0x20] sm:$0xff] %v274
    %291 = vst [vmem:[#allocation4 + $0x28] sm:$0xff] %v275
    %292 = vst [vmem:[#allocation4 + $0x30] sm:$0xff] %v276
    %293 = vst [vmem:[#allocation4 + $0x38] sm:$0xff] %v277
    %v294 = vld [vmem:[#allocation2] sm:$0xff]
    %v295 = vld [vmem:[#allocation2 + $0x8] sm:$0xff]
    %v296 = vld [vmem:[#allocation2 + $0x10] sm:$0xff]
    %v297 = vld [vmem:[#allocation2 + $0x18] sm:$0xff]
    %v298 = vld [vmem:[#allocation2 + $0x20] sm:$0xff]
    %v299 = vld [vmem:[#allocation2 + $0x28] sm:$0xff]
    %v300 = vld [vmem:[#allocation2 + $0x30] sm:$0xff]
    %v301 = vld [vmem:[#allocation2 + $0x38] sm:$0xff]
    %v302 = vld [vmem:[#allocation2 + $0x40] sm:$0xff]
    %v303 = vld [vmem:[#allocation2 + $0x48] sm:$0xff]
    %v304 = vld [vmem:[#allocation2 + $0x50] sm:$0xff]
    %v305 = vld [vmem:[#allocation2 + $0x58] sm:$0xff]
    %v306 = vld [vmem:[#allocation2 + $0x60] sm:$0xff]
    %v307 = vld [vmem:[#allocation2 + $0x68] sm:$0xff]
    %v308 = vld [vmem:[#allocation2 + $0x70] sm:$0xff]
    %v309 = vld [vmem:[#allocation2 + $0x78] sm:$0xff]
    %v310 = vadd.f32 %v294, %v167
    %v311 = vadd.f32 %v295, %v169
    %v312 = vadd.f32 %v296, %v220
    %v313 = vadd.f32 %v297, %v222
    %v314 = vadd.f32 %v298, %v171
    %v315 = vadd.f32 %v299, %v173
    %v316 = vadd.f32 %v300, %v224
    %v317 = vadd.f32 %v301, %v226
    %v318 = vadd.f32 %v302, %v177
    %v319 = vadd.f32 %v303, %v179
    %v320 = vadd.f32 %v304, %v230
    %v321 = vadd.f32 %v305, %v232
    %v322 = vadd.f32 %v306, %v181
    %v323 = vadd.f32 %v307, %v183
    %v324 = vadd.f32 %v308, %v234
    %v325 = vadd.f32 %v309, %v236
    %326 = vst [vmem:[#allocation2] sm:$0xff] %v310
    %327 = vst [vmem:[#allocation2 + $0x8] sm:$0xff] %v311
    %328 = vst [vmem:[#allocation2 + $0x10] sm:$0xff] %v312
    %329 = vst [vmem:[#allocation2 + $0x18] sm:$0xff] %v313
    %330 = vst [vmem:[#allocation2 + $0x20] sm:$0xff] %v314
    %331 = vst [vmem:[#allocation2 + $0x28] sm:$0xff] %v315
    %332 = vst [vmem:[#allocation2 + $0x30] sm:$0xff] %v316
    %333 = vst [vmem:[#allocation2 + $0x38] sm:$0xff] %v317
    %334 = vst [vmem:[#allocation2 + $0x40] sm:$0xff] %v318
    %335 = vst [vmem:[#allocation2 + $0x48] sm:$0xff] %v319
    %336 = vst [vmem:[#allocation2 + $0x50] sm:$0xff] %v320
    %337 = vst [vmem:[#allocation2 + $0x58] sm:$0xff] %v321
    %338 = vst [vmem:[#allocation2 + $0x60] sm:$0xff] %v322
    %339 = vst [vmem:[#allocation2 + $0x68] sm:$0xff] %v323
    %340 = vst [vmem:[#allocation2 + $0x70] sm:$0xff] %v324
    %341 = vst [vmem:[#allocation2 + $0x78] sm:$0xff] %v325
    %v342 = vld [vmem:[#allocation3] sm:$0xff]
    %v343 = vld [vmem:[#allocation3 + $0x8] sm:$0xff]
    %v344 = vld [vmem:[#allocation3 + $0x10] sm:$0xff]
    %v345 = vld [vmem:[#allocation3 + $0x18] sm:$0xff]
    %v346 = vld [vmem:[#allocation3 + $0x20] sm:$0xff]
    %v347 = vld [vmem:[#allocation3 + $0x28] sm:$0xff]
    %v348 = vld [vmem:[#allocation3 + $0x30] sm:$0xff]
    %v349 = vld [vmem:[#allocation3 + $0x38] sm:$0xff]
    %v350 = vld [vmem:[#allocation3 + $0x40] sm:$0xff]
    %v351 = vld [vmem:[#allocation3 + $0x48] sm:$0xff]
    %v352 = vld [vmem:[#allocation3 + $0x50] sm:$0xff]
    %v353 = vld [vmem:[#allocation3 + $0x58] sm:$0xff]
    %v354 = vld [vmem:[#allocation3 + $0x60] sm:$0xff]
    %v355 = vld [vmem:[#allocation3 + $0x68] sm:$0xff]
    %v356 = vld [vmem:[#allocation3 + $0x70] sm:$0xff]
    %v357 = vld [vmem:[#allocation3 + $0x78] sm:$0xff]
    %v358 = vmul.f32 %v167, %v167
    %v359 = vmul.f32 %v169, %v169
    %v360 = vmul.f32 %v220, %v220
    %v361 = vmul.f32 %v222, %v222
    %v362 = vmul.f32 %v171, %v171
    %v363 = vmul.f32 %v173, %v173
    %v364 = vmul.f32 %v224, %v224
    %v365 = vmul.f32 %v226, %v226
    %v366 = vmul.f32 %v177, %v177
    %v367 = vmul.f32 %v179, %v179
    %v368 = vmul.f32 %v230, %v230
    %v369 = vmul.f32 %v232, %v232
    %v370 = vmul.f32 %v181, %v181
    %v371 = vmul.f32 %v183, %v183
    %v372 = vmul.f32 %v234, %v234
    %v373 = vmul.f32 %v236, %v236
    %v374 = vadd.f32 %v342, %v358
    %v375 = vadd.f32 %v343, %v359
    %v376 = vadd.f32 %v344, %v360
    %v377 = vadd.f32 %v345, %v361
    %v378 = vadd.f32 %v346, %v362
    %v379 = vadd.f32 %v347, %v363
    %v380 = vadd.f32 %v348, %v364
    %v381 = vadd.f32 %v349, %v365
    %v382 = vadd.f32 %v350, %v366
    %v383 = vadd.f32 %v351, %v367
    %v384 = vadd.f32 %v352, %v368
    %v385 = vadd.f32 %v353, %v369
    %v386 = vadd.f32 %v354, %v370
    %v387 = vadd.f32 %v355, %v371
    %v388 = vadd.f32 %v356, %v372
    %v389 = vadd.f32 %v357, %v373
    %390 = vst [vmem:[#allocation3] sm:$0xff] %v374
    %391 = vst [vmem:[#allocation3 + $0x8] sm:$0xff] %v375
    %392 = vst [vmem:[#allocation3 + $0x10] sm:$0xff] %v376
    %393 = vst [vmem:[#allocation3 + $0x18] sm:$0xff] %v377
    %394 = vst [vmem:[#allocation3 + $0x20] sm:$0xff] %v378
    %395 = vst [vmem:[#allocation3 + $0x28] sm:$0xff] %v379
    %396 = vst [vmem:[#allocation3 + $0x30] sm:$0xff] %v380
    %397 = vst [vmem:[#allocation3 + $0x38] sm:$0xff] %v381
    %398 = vst [vmem:[#allocation3 + $0x40] sm:$0xff] %v382
    %399 = vst [vmem:[#allocation3 + $0x48] sm:$0xff] %v383
    %400 = vst [vmem:[#allocation3 + $0x50] sm:$0xff] %v384
    %401 = vst [vmem:[#allocation3 + $0x58] sm:$0xff] %v385
    %402 = vst [vmem:[#allocation3 + $0x60] sm:$0xff] %v386
    %403 = vst [vmem:[#allocation3 + $0x68] sm:$0xff] %v387
    %404 = vst [vmem:[#allocation3 + $0x70] sm:$0xff] %v388
    %405 = vst [vmem:[#allocation3 + $0x78] sm:$0xff] %v389
    // Predicated region
    $region18: #{tpu_custom_call.1} parent=1 // pred_check
      %p406 = pneg %p19
    $region19: #{tpu_custom_call.1} parent=1 // pred_check_branch
      %408 = sbr.rel (%p406) target = $region21
    $region20: #{tpu_custom_call.1} parent=1 // pred_region
      %v409 = vld [vmem:[#allocation2] sm:$0xff]
      %v410 = vld [vmem:[#allocation2 + $0x8] sm:$0xff]
      %v411 = vld [vmem:[#allocation2 + $0x10] sm:$0xff]
      %v412 = vld [vmem:[#allocation2 + $0x18] sm:$0xff]
      %v413 = vld [vmem:[#allocation2 + $0x20] sm:$0xff]
      %v414 = vld [vmem:[#allocation2 + $0x28] sm:$0xff]
      %v415 = vld [vmem:[#allocation2 + $0x30] sm:$0xff]
      %v416 = vld [vmem:[#allocation2 + $0x38] sm:$0xff]
      %v417 = vld [vmem:[#allocation2 + $0x40] sm:$0xff]
      %v418 = vld [vmem:[#allocation2 + $0x48] sm:$0xff]
      %v419 = vld [vmem:[#allocation2 + $0x50] sm:$0xff]
      %v420 = vld [vmem:[#allocation2 + $0x58] sm:$0xff]
      %v421 = vld [vmem:[#allocation2 + $0x60] sm:$0xff]
      %v422 = vld [vmem:[#allocation2 + $0x68] sm:$0xff]
      %v423 = vld [vmem:[#allocation2 + $0x70] sm:$0xff]
      %v424 = vld [vmem:[#allocation2 + $0x78] sm:$0xff]
      %v425 = vadd.f32 %v409, %v410
      %v426 = vadd.f32 %v425, %v411
      %v427 = vadd.f32 %v426, %v412
      %428 = vadd.xlane.f32.xlu0 %v427
      %v429 = vpop.xlane.xlu0 %428
      %v430 = vadd.f32 %v413, %v414
      %v431 = vadd.f32 %v430, %v415
      %v432 = vadd.f32 %v431, %v416
      %433 = vadd.xlane.f32.xlu0 %v432
      %v434 = vpop.xlane.xlu0 %433
      %v435 = vadd.f32 %v417, %v418
      %v436 = vadd.f32 %v435, %v419
      %v437 = vadd.f32 %v436, %v420
      %438 = vadd.xlane.f32.xlu0 %v437
      %v439 = vpop.xlane.xlu0 %438
      %v440 = vadd.f32 %v421, %v422
      %v441 = vadd.f32 %v440, %v423
      %v442 = vadd.f32 %v441, %v424
      %443 = vadd.xlane.f32.xlu0 %v442
      %v444 = vpop.xlane.xlu0 %443
      %vm445 = vcmask 7168
      %446 = vst.msk [vmem:[%s4] sm:$0xff] %vm445, %v429
      %447 = vst.msk [vmem:[%s4 + $0x8] sm:$0xff] %vm445, %v434
      %448 = vst.msk [vmem:[%s4 + $0x10] sm:$0xff] %vm445, %v439
      %449 = vst.msk [vmem:[%s4 + $0x18] sm:$0xff] %vm445, %v444
      %v450 = vld [vmem:[#allocation3] sm:$0xff]
      %v451 = vld [vmem:[#allocation3 + $0x8] sm:$0xff]
      %v452 = vld [vmem:[#allocation3 + $0x10] sm:$0xff]
      %v453 = vld [vmem:[#allocation3 + $0x18] sm:$0xff]
      %v454 = vld [vmem:[#allocation3 + $0x20] sm:$0xff]
      %v455 = vld [vmem:[#allocation3 + $0x28] sm:$0xff]
      %v456 = vld [vmem:[#allocation3 + $0x30] sm:$0xff]
      %v457 = vld [vmem:[#allocation3 + $0x38] sm:$0xff]
      %v458 = vld [vmem:[#allocation3 + $0x40] sm:$0xff]
      %v459 = vld [vmem:[#allocation3 + $0x48] sm:$0xff]
      %v460 = vld [vmem:[#allocation3 + $0x50] sm:$0xff]
      %v461 = vld [vmem:[#allocation3 + $0x58] sm:$0xff]
      %v462 = vld [vmem:[#allocation3 + $0x60] sm:$0xff]
      %v463 = vld [vmem:[#allocation3 + $0x68] sm:$0xff]
      %v464 = vld [vmem:[#allocation3 + $0x70] sm:$0xff]
      %v465 = vld [vmem:[#allocation3 + $0x78] sm:$0xff]
      %v466 = vadd.f32 %v450, %v451
      %v467 = vadd.f32 %v466, %v452
      %v468 = vadd.f32 %v467, %v453
      %469 = vadd.xlane.f32.xlu0 %v468
      %v470 = vpop.xlane.xlu0 %469
      %v471 = vadd.f32 %v454, %v455
      %v472 = vadd.f32 %v471, %v456
      %v473 = vadd.f32 %v472, %v457
      %474 = vadd.xlane.f32.xlu0 %v473
      %v475 = vpop.xlane.xlu0 %474
      %v476 = vadd.f32 %v458, %v459
      %v477 = vadd.f32 %v476, %v460
      %v478 = vadd.f32 %v477, %v461
      %479 = vadd.xlane.f32.xlu0 %v478
      %v480 = vpop.xlane.xlu0 %479
      %v481 = vadd.f32 %v462, %v463
      %v482 = vadd.f32 %v481, %v464
      %v483 = vadd.f32 %v482, %v465
      %484 = vadd.xlane.f32.xlu0 %v483
      %v485 = vpop.xlane.xlu0 %484
      %486 = vst.msk [vmem:[%s5] sm:$0xff] %vm445, %v470
      %487 = vst.msk [vmem:[%s5 + $0x8] sm:$0xff] %vm445, %v475
      %488 = vst.msk [vmem:[%s5 + $0x10] sm:$0xff] %vm445, %v480
      %489 = vst.msk [vmem:[%s5 + $0x18] sm:$0xff] %vm445, %v485
    $region21: #{tpu_custom_call.1} parent=1 // pred_fallthru
      _
    // Predicated region
    $region22: #{tpu_custom_call.1} parent=1 // pred_check
      _
    $region23: #{tpu_custom_call.1} parent=1 // pred_check_branch
      %491 = sbr.rel (0) target = $region25
    $region24: #{tpu_custom_call.1} parent=1 // pred_region
      %s493 = ssub.s32 1024, 1024
      %494 = vsyncadd [#allocation5], %s493
      %s495 = sshll.u32 [#allocation4], 4
      %s496 = int_to_ptr.vmem [resolvable:$true] %s495
      %501 = dma.vmem_to_hbm [thread:$0]  %s496, 1024, %s3, [#allocation5], 256, 256, 16
    $region25: #{tpu_custom_call.1} parent=1 // pred_fallthru
      _
    // Predicated region
    $region26: #{tpu_custom_call.1} parent=1 // pred_check
      _
    $region27: #{tpu_custom_call.1} parent=1 // pred_check_branch
      %503 = sbr.rel (0) target = $region29
    $region28: #{tpu_custom_call.1} parent=1 // pred_region
      _
    $region29: #{tpu_custom_call.1} parent=1 // pred_fallthru
      _
    // Predicated region
    $region30: #{tpu_custom_call.1} parent=1 // pred_check
      _
    $region31: #{tpu_custom_call.1} parent=1 // pred_check_branch
      %505 = sbr.rel (0) target = $region33
    $region32: #{tpu_custom_call.1} parent=1 // pred_region
      _
    $region33: #{tpu_custom_call.1} parent=1 // pred_fallthru
      _
    // Predicated region
    $region34: #{tpu_custom_call.1} parent=1 // pred_check
      _
    $region35: #{tpu_custom_call.1} parent=1 // pred_check_branch
      %507 = sbr.rel (0) target = $region37
    $region36: #{tpu_custom_call.1} parent=1 // pred_region
      %508 = dma.done [#allocation5], 1024
    $region37: #{tpu_custom_call.1} parent=1 // pred_fallthru
      _
    // Predicated region
    $region38: #{tpu_custom_call.1} parent=1 // pred_check
      _
    $region39: #{tpu_custom_call.1} parent=1 // pred_check_branch
      %510 = sbr.rel (0) target = $region41
    $region40: #{tpu_custom_call.1} parent=1 // pred_region
      _
    $region41: #{tpu_custom_call.1} parent=1 // pred_fallthru
      _
    // Predicated region
    $region42: #{tpu_custom_call.1} parent=1 // pred_check
      _
    $region43: #{tpu_custom_call.1} parent=1 // pred_check_branch
      %512 = sbr.rel (0) target = $region45
    $region44: #{tpu_custom_call.1} parent=1 // pred_region
      _
    $region45: #{tpu_custom_call.1} parent=1 // pred_fallthru
      _
    %513 = vsyncpa [#allocation5], 1

</llo_original>
